<compile_context>
chip_gen: v7x
topology: tpu7x:2x2x1
jax: 0.10.0
libtpu: 0.0.40
codegen_flags: <defaults>
</compile_context>

<pallas_src>
import jax
import jax.numpy as jnp
from jax.experimental import pallas as pl
from jax.experimental.pallas import tpu as pltpu


# ----------------------------------------------------------------------------
# Generation-aware VMEM budgets
# ----------------------------------------------------------------------------
def _vmem_budgets():
    """(vmem_limit_bytes, per-tile working-set budget) sized for the chip.

    v5e/v6e: 128 MiB physical -> limit ~96 MiB, tile budget ~48 MiB.
    v7x:      64 MiB physical -> limit ~48 MiB, tile budget ~24 MiB.
    """
    phys = 128 * 1024 * 1024
    try:
        info = pltpu.get_tpu_info()
        phys = int(getattr(info, "vmem_capacity_bytes", phys))
    except Exception:
        pass
    vmem_limit = min(int(phys * 3 // 4), 96 * 1024 * 1024)
    tile_budget = vmem_limit // 2
    return vmem_limit, tile_budget


def _round_down_mult(x, m):
    return max(m, (x // m) * m)


# ----------------------------------------------------------------------------
# Kernels: 1x1 conv (channel mix) on the MXU, with / without fused residual
# ----------------------------------------------------------------------------
def _conv1x1_kernel(w_ref, b_ref, x_ref, o_ref):
    # w: [C_out, C_in]   x: [C_in, pix_tile]   b: [C_out, 1]
    y = jnp.dot(w_ref[...], x_ref[...], preferred_element_type=jnp.float32)
    o_ref[...] = (y + b_ref[...].astype(jnp.float32)).astype(o_ref.dtype)


def _conv1x1_residual_kernel(w_ref, b_ref, x_ref, o_ref):
    # Fused epilogue: conv(x) + bias + x  (requires C_out == C_in).
    x = x_ref[...]
    y = jnp.dot(w_ref[...], x, preferred_element_type=jnp.float32)
    o_ref[...] = (y + b_ref[...].astype(jnp.float32)
                  + x.astype(jnp.float32)).astype(o_ref.dtype)


def _pick_pixel_tile(hw, n, c_in, c_out, in_itemsize, out_itemsize, tile_budget):
    # Per-lane working set: x + out streams (double-buffered) plus the f32 MXU
    # result and the f32 residual cast (single-buffered epilogue temporaries).
    per_lane = 2 * (c_in * in_itemsize + c_out * out_itemsize) + 4 * (c_out + c_in)
    per_lane = max(per_lane, 1)
    max_lanes = _round_down_mult(tile_budget // per_lane, 128)
    target = min(8192, max_lanes)
    if hw <= target:
        pix_tile = hw                       # one full-extent tile (always legal)
    else:
        pix_tile = target                   # multiple of 128; ragged tail masked
    # v7x has 2 TensorCores: guarantee >= 2 grid steps along a parallel axis.
    num_pix_tiles = -(-hw // pix_tile)
    if n * num_pix_tiles < 2 and hw >= 256:
        pix_tile = max(128, ((-(-hw // 2) + 127) // 128) * 128)
    return pix_tile


def _conv1x1(x, weight, bias2, fuse_residual):
    n, c_in, h, w = x.shape
    c_out = weight.shape[0]
    hw = h * w
    x3 = x.reshape(n, c_in, hw)                      # lane-dense pixel axis

    vmem_limit, tile_budget = _vmem_budgets()
    pix_tile = _pick_pixel_tile(
        hw, n, c_in, c_out,
        jnp.dtype(x.dtype).itemsize, jnp.dtype(x.dtype).itemsize, tile_budget)
    grid = (n, pl.cdiv(hw, pix_tile))                # ragged last tile is masked

    kernel = _conv1x1_residual_kernel if fuse_residual else _conv1x1_kernel

    out3 = pl.pallas_call(
        kernel,
        out_shape=jax.ShapeDtypeStruct((n, c_out, hw), x.dtype),
        grid=grid,
        in_specs=[
            # Weight / bias: same block every step -> stay resident in VMEM.
            pl.BlockSpec((c_out, c_in), lambda ni, pi: (0, 0)),
            pl.BlockSpec((c_out, 1), lambda ni, pi: (0, 0)),
            # x: batch axis squeezed, channels full, pixel axis tiled.
            pl.BlockSpec((None, c_in, pix_tile), lambda ni, pi: (ni, 0, pi)),
        ],
        out_specs=pl.BlockSpec((None, c_out, pix_tile),
                               lambda ni, pi: (ni, 0, pi)),
        compiler_params=pltpu.CompilerParams(
            dimension_semantics=("parallel", "parallel"),
            vmem_limit_bytes=vmem_limit,
        ),
    )(weight, bias2, x3)
    return out3.reshape(n, c_out, h, w)


# ----------------------------------------------------------------------------
# Standalone tiled residual add — ONLY for fns that are themselves unfusable
# Pallas kernels.  Plain JAX fns should take the `fn(x) + x` path instead.
# ----------------------------------------------------------------------------
def _residual_add_kernel(fx_ref, x_ref, o_ref):
    o_ref[...] = fx_ref[...] + x_ref[...]


def _pick_add_tiles(rows, cols, itemsize, tile_budget):
    row_tile = rows if rows <= 512 else 512          # 512 is a multiple of 8
    per_col = max(6 * row_tile * itemsize, 1)        # fx + x + out, double-buffered
    max_cols = _round_down_mult(tile_budget // per_col, 128)
    target = min(8192, max_cols)
    col_tile = cols if cols <= target else target
    return row_tile, col_tile


def _residual_add(fx, x):
    assert fx.shape == x.shape and fx.dtype == x.dtype
    shape = x.shape
    if x.ndim >= 2:
        cols = shape[-1] * shape[-2]                 # lane-dense slab
    else:
        cols = shape[-1]
    rows = max(x.size // max(cols, 1), 1)
    fx2 = fx.reshape(rows, cols)
    x2 = x.reshape(rows, cols)

    vmem_limit, tile_budget = _vmem_budgets()
    row_tile, col_tile = _pick_add_tiles(
        rows, cols, jnp.dtype(x.dtype).itemsize, tile_budget)
    grid = (pl.cdiv(rows, row_tile), pl.cdiv(cols, col_tile))

    # NOTE: no input_output_aliases -- aliasing removes an allocation, not an
    # HBM stream; the real bandwidth win is fusing "+x" into fn's own kernel.
    out2 = pl.pallas_call(
        _residual_add_kernel,
        out_shape=jax.ShapeDtypeStruct((rows, cols), x.dtype),
        grid=grid,
        in_specs=[
            pl.BlockSpec((row_tile, col_tile), lambda i, j: (i, j)),
            pl.BlockSpec((row_tile, col_tile), lambda i, j: (i, j)),
        ],
        out_specs=pl.BlockSpec((row_tile, col_tile), lambda i, j: (i, j)),
        compiler_params=pltpu.CompilerParams(
            dimension_semantics=("parallel", "parallel"),
            vmem_limit_bytes=vmem_limit,
        ),
    )(fx2, x2)
    return out2.reshape(shape)


# ----------------------------------------------------------------------------
# Example wrapped fn: 1x1 conv with an optional fused-residual entry point
# ----------------------------------------------------------------------------
class PointwiseConv1x1:
    """fn(x_nchw) = Conv2d(C_in, C_out, kernel_size=1)(x), Pallas MXU kernel."""

    def __init__(self, weight, bias):
        self.weight = weight
        self.c_out, self.c_in = weight.shape
        self.bias2 = bias.reshape(self.c_out, 1)

    def __call__(self, x):
        return _conv1x1(x, self.weight, self.bias2, fuse_residual=False)

    def call_with_residual(self, x):
        # Residual fusion only legal for C_out == C_in.
        assert self.c_out == self.c_in
        return _conv1x1(x, self.weight, self.bias2, fuse_residual=True)


def make_pointwise_conv_fn(weight, bias):
    return PointwiseConv1x1(weight, bias)


# ----------------------------------------------------------------------------
# The Residual module: wraps an arbitrary JAX callable fn
# ----------------------------------------------------------------------------
class Residual:
    def __init__(self, fn):
        self.fn = fn

    def __call__(self, x):
        fused = getattr(self.fn, "call_with_residual", None)
        if fused is not None:
            # Single fused Pallas kernel: fn(x) + x in the conv epilogue.
            return fused(x)
        if getattr(self.fn, "pallas_unfusable", False):
            # fn is an opaque Pallas kernel whose epilogue we cannot touch.
            return _residual_add(self.fn(x), x)
        # Plain JAX fn: let XLA fuse the "+ x" into fn's own HBM pass.
        return self.fn(x) + x


if __name__ == "__main__":
    key = jax.random.PRNGKey(0)
    kx, kw, kb = jax.random.split(key, 3)

    N, C, H, W = 2, 4, 16, 16
    x = jax.random.normal(kx, (N, C, H, W), dtype=jnp.float32)

    # Deterministic parameters for the example wrapped fn (1x1 conv, C -> C).
    weight = jax.random.normal(kw, (C, C), dtype=jnp.float32) * 0.1
    bias = jax.random.normal(kb, (C,), dtype=jnp.float32) * 0.1

    # Path 1: fused conv + residual (one Pallas kernel, one HBM pass over x).
    residual = Residual(make_pointwise_conv_fn(weight, bias))
    out = jax.block_until_ready(jax.jit(residual)(x))
    ref = (jnp.einsum("oc,nchw->nohw", weight, x)
           + bias[None, :, None, None] + x)
    assert out.shape == x.shape and out.dtype == x.dtype
    assert jnp.allclose(out, ref, atol=1e-5, rtol=1e-5)

    # Path 2: plain JAX fn -> XLA-fused fn(x) + x (no extra Pallas add pass).
    generic = Residual(jnp.tanh)
    out2 = jax.block_until_ready(jax.jit(generic)(x))
    assert jnp.allclose(out2, jnp.tanh(x) + x, atol=1e-5, rtol=1e-5)

    # Path 3: exercise the standalone Pallas residual-add kernel (reserved for
    # fns that are themselves unfusable Pallas calls).
    fx = jnp.tanh(x)
    out3 = jax.block_until_ready(jax.jit(_residual_add)(fx, x))
    assert jnp.allclose(out3, fx + x, atol=1e-5, rtol=1e-5)

    print("KERNEL_OK")
</pallas_src>

<mosaic_0001>
module attributes {stable_mosaic.version = 11 : i64} {
  func.func @_conv1x1_residual_kernel(%arg0: i32, %arg1: i32, %arg2: memref<4x4xf32, #tpu.memory_space<vmem>>, %arg3: memref<4x1xf32, #tpu.memory_space<vmem>>, %arg4: memref<1x4x256xf32, #tpu.memory_space<vmem>>, %arg5: memref<1x4x256xf32, #tpu.memory_space<vmem>>) attributes {dimension_semantics = [#tpu.dimension_semantics<parallel>, #tpu.dimension_semantics<parallel>], iteration_bounds = array<i64: 2, 1>, scalar_prefetch = 0 : i64, scratch_operands = 0 : i64, tpu.core_type = #tpu.core_type<tc>, window_params = [{pipeline_mode = #tpu.pipeline_mode<synchronous>, transform_indices = @transform_0, window_bounds = array<i64: 4, 4>}, {pipeline_mode = #tpu.pipeline_mode<synchronous>, transform_indices = @transform_1, window_bounds = array<i64: 4, 1>}, {transform_indices = @transform_2, window_bounds = array<i64: 1, 4, 256>}, {transform_indices = @transform_3, window_bounds = array<i64: 1, 4, 256>}]} {
    %c0 = arith.constant 0 : index
    %c0_0 = arith.constant 0 : index
    %c0_1 = arith.constant 0 : index
    %0 = vector.load %arg4[%c0, %c0_0, %c0_1] : memref<1x4x256xf32, #tpu.memory_space<vmem>>, vector<1x4x256xf32>
    %1 = vector.shape_cast %0 : vector<1x4x256xf32> to vector<4x256xf32>
    %c0_2 = arith.constant 0 : index
    %c0_3 = arith.constant 0 : index
    %2 = vector.load %arg2[%c0_2, %c0_3] : memref<4x4xf32, #tpu.memory_space<vmem>>, vector<4x4xf32>
    %cst = arith.constant dense<0.000000e+00> : vector<4x256xf32>
    %3 = tpu.matmul %2, %1, %cst {dimension_numbers = #tpu.dot_dimension_numbers<[1], [0], [0], [1], [0, 0, 1, 1], [], []>} : vector<4x4xf32>, vector<4x256xf32>, vector<4x256xf32> -> vector<4x256xf32>
    %c0_4 = arith.constant 0 : index
    %c0_5 = arith.constant 0 : index
    %4 = vector.load %arg3[%c0_4, %c0_5] : memref<4x1xf32, #tpu.memory_space<vmem>>, vector<4x1xf32>
    %5 = vector.broadcast %4 : vector<4x1xf32> to vector<4x256xf32>
    %6 = arith.addf %3, %5 : vector<4x256xf32>
    %7 = arith.addf %6, %1 : vector<4x256xf32>
    %c0_6 = arith.constant 0 : index
    %c0_7 = arith.constant 0 : index
    %c0_8 = arith.constant 0 : index
    %8 = vector.load %arg5[%c0_6, %c0_7, %c0_8] : memref<1x4x256xf32, #tpu.memory_space<vmem>>, vector<1x4x256xf32>
    %9 = vector.shape_cast %8 : vector<1x4x256xf32> to vector<4x256xf32>
    %10 = vector.shape_cast %7 : vector<4x256xf32> to vector<1x4x256xf32>
    tpu.vector_store %arg5[%c0_6, %c0_7, %c0_8], %10 {strides = array<i32>} : memref<1x4x256xf32, #tpu.memory_space<vmem>>, vector<1x4x256xf32>,
    return
  }
  func.func @transform_0(%arg0: i32, %arg1: i32) -> (i32, i32) {
    %c0_i32 = arith.constant 0 : i32
    %c0_i32_0 = arith.constant 0 : i32
    %c0_i32_1 = arith.constant 0 : i32
    return %c0_i32, %c0_i32_0 : i32, i32
  }
  func.func @transform_1(%arg0: i32, %arg1: i32) -> (i32, i32) {
    %c0_i32 = arith.constant 0 : i32
    %c0_i32_0 = arith.constant 0 : i32
    %c0_i32_1 = arith.constant 0 : i32
    return %c0_i32, %c0_i32_0 : i32, i32
  }
  func.func @transform_2(%arg0: i32, %arg1: i32) -> (i32, i32, i32) {
    %c0_i32 = arith.constant 0 : i32
    %c0_i32_0 = arith.constant 0 : i32
    return %arg0, %c0_i32, %arg1 : i32, i32, i32
  }
  func.func @transform_3(%arg0: i32, %arg1: i32) -> (i32, i32, i32) {
    %c0_i32 = arith.constant 0 : i32
    %c0_i32_0 = arith.constant 0 : i32
    return %arg0, %c0_i32, %arg1 : i32, i32, i32
  }
}

</mosaic_0001>

<llo_original>
// kernel: _unnamed_function_.1
$region0: #{_unnamed_function_.1}
  #allocation0 [shape = 'u32[]', space=smem, size = 0x4, offset = 0x4, fixed_abs, tag = 'smem constant byte address 0x4 - core index']
  #allocation1 [shape = 'u32[144,128]{1,0:T(1,128)}', space=vmem, size = 0x12000, scoped, tag = 'internal scratch']
  %s0 = inlined_call_operand.hbm [shape: f32[4,4], index: 0, kind: input, shape index: {}]
  %s1 = inlined_call_operand.hbm [shape: f32[4,1], index: 1, kind: input, shape index: {}]
  %s2 = inlined_call_operand.hbm [shape: f32[2,4,256], index: 2, kind: input, shape index: {}]
  %s3 = inlined_call_operand.hbm [shape: f32[2,4,256], index: 3, kind: output, shape index: {}]
  %s4 = sld [smem:[#allocation0]]
  $region57: #{_unnamed_function_.1} parent=0
    _
  %s6 = ssub.s32 1, %s4
  %s7 = scalar_select 0, %s6, %s4
  $region1: #{_unnamed_function_.1} parent=0
    #allocation2 [shape = 'u8[2048]{0}', space=vmem, size = 0x800, scoped, tag = 'input window, operand 0, single buffered']
    #allocation3 [shape = 's32[2]{0}', space=sflag, size = 0x8, scoped, tag = 'scoped memory for _unnamed_function_.1']
    #allocation4 [shape = 's32[2]{0}', space=sflag, size = 0x8, scoped, tag = 'scoped memory for _unnamed_function_.1']
    #allocation5 [shape = 'u8[2048]{0}', space=vmem, size = 0x800, scoped, tag = 'input window, operand 1, single buffered']
    #allocation6 [shape = 's32[1]{0}', space=sflag, size = 0x4, scoped, tag = 'scoped memory for _unnamed_function_.1']
    #allocation7 [shape = 'u8[8192]{0}', space=vmem, size = 0x2000, scoped, tag = 'input window, operand 2']
    #allocation8 [shape = 'u8[8192]{0}', space=vmem, size = 0x2000, scoped, tag = 'output window, operand 0']
    %8 = vsyncpa [#allocation3], 0
    %9 = vsyncpa [#allocation6], 0
    %10 = vsyncpa [#allocation4], 0
    %s11 = scalar_lea.sflag [#allocation4], 1
    %12 = vsyncpa %s11, 0
    loop: start=0, step=1, limit=4
    $region2: #{_unnamed_function_.1} parent=1 // loop_pre_header
      _
    $region3: #{_unnamed_function_.1} parent=1 // loop_header
      %s14 = sphi 0, %s18
      %p15 = scmp.ge.s32.totalorder %s14, 4
      %s21 = sphi 0, %s33
      %s22 = sphi 0, %s29
      %s23 = sphi 0, %s21
      %s24 = sphi 0, %s22
      %s25 = sphi 0, %s23
      %s26 = sphi 0, %s24
      %s34 = sphi 0, %s34
      %s36 = sphi 0, %s34
      %s37 = sphi 0, %s36
      %s51 = sphi 0, %s37
      %s55 = sphi 0, %s55
      %s57 = sphi 0, %s55
      %s58 = sphi 0, %s57
      %s72 = sphi 0, %s58
      %s80 = sphi 0, %s82
      %s83 = sphi 0, %s80
      %s84 = sphi 0, %s83
      %s100 = sphi 0, %s84
      %s108 = sphi 0, %s110
      %s111 = sphi 0, %s108
      %s112 = sphi 0, %s111
      %s128 = sphi 0, %s112
    $region4: #{_unnamed_function_.1} parent=1 // loop_header_branch
      %17 = sbr.rel (%p15) target = $region8
    $region5: #{_unnamed_function_.1} parent=1 // loop_body
      %s19 = ssub.s32 %s14, 1
      %s20 = ssub.s32 %s14, 2
      %s27 = sadd.s32 1, %s22
      %p28 = scmp.ge.s32.totalorder %s27, 1
      %s29 = scalar_select %p28, 0, %s27
      %s30 = sadd.s32 1, %s21
      %s31 = scalar_select %p28, %s30, %s21
      %p32 = scmp.ge.s32.totalorder %s31, 2
      %s33 = scalar_select %p32, 0, %s31
      %s35 = sadd.s32 %s34, 1
      %p38 = scmp.eq.s32.totalorder %s14, 1
      %p39 = scmp.ne.s32.totalorder %s34, %s36
      %p40 = scmp.eq.s32.totalorder %s14, 0
      %p41 = por %p39, %p40
      %p42 = scmp.ne.s32.totalorder %s34, %s36
      %p43 = scmp.eq.s32.totalorder %s19, 1
      %p44 = por %p42, %p43
      %p45 = scmp.ne.s32.totalorder %s36, %s37
      %p46 = scmp.eq.s32.totalorder %s19, 0
      %p47 = por %p45, %p46
      %p48 = scmp.ne.s32.totalorder %s36, %s37
      %p49 = scmp.eq.s32.totalorder %s20, 1
      %p50 = por %p48, %p49
      %p52 = scmp.ne.s32.totalorder %s37, %s51
      %p53 = scmp.eq.s32.totalorder %s20, 0
      %p54 = por %p52, %p53
      %s56 = sadd.s32 %s55, 1
      %p59 = scmp.eq.s32.totalorder %s14, 1
      %p60 = scmp.ne.s32.totalorder %s55, %s57
      %p61 = scmp.eq.s32.totalorder %s14, 0
      %p62 = por %p60, %p61
      %p63 = scmp.ne.s32.totalorder %s55, %s57
      %p64 = scmp.eq.s32.totalorder %s19, 1
      %p65 = por %p63, %p64
      %p66 = scmp.ne.s32.totalorder %s57, %s58
      %p67 = scmp.eq.s32.totalorder %s19, 0
      %p68 = por %p66, %p67
      %p69 = scmp.ne.s32.totalorder %s57, %s58
      %p70 = scmp.eq.s32.totalorder %s20, 1
      %p71 = por %p69, %p70
      %p73 = scmp.ne.s32.totalorder %s58, %s72
      %p74 = scmp.eq.s32.totalorder %s20, 0
      %p75 = por %p73, %p74
      %s76 = ssub.s32 %s21, %s33
      %s77 = ssub.s32 %s22, %s29
      %s78 = sor.u32 %s76, %s77
      %p79 = scmp.eq.s32.totalorder %s78, 0
      %s81 = sadd.s32 %s80, 1
      %s82 = scalar_select %p79, %s80, %s81
      %p85 = pneg %p79
      %p86 = scmp.eq.s32.totalorder %s14, 1
      %p87 = por %p85, %p86
      %p88 = scmp.ne.s32.totalorder %s80, %s83
      %p89 = scmp.eq.s32.totalorder %s14, 0
      %p90 = por %p88, %p89
      %p91 = scmp.ne.s32.totalorder %s80, %s83
      %p92 = scmp.eq.s32.totalorder %s19, 1
      %p93 = por %p91, %p92
      %p94 = scmp.ne.s32.totalorder %s83, %s84
      %p95 = scmp.eq.s32.totalorder %s19, 0
      %p96 = por %p94, %p95
      %p97 = scmp.ne.s32.totalorder %s83, %s84
      %p98 = scmp.eq.s32.totalorder %s20, 1
      %p99 = por %p97, %p98
      %p101 = scmp.ne.s32.totalorder %s84, %s100
      %p102 = scmp.eq.s32.totalorder %s20, 0
      %p103 = por %p101, %p102
      %s104 = ssub.s32 %s21, %s33
      %s105 = ssub.s32 %s22, %s29
      %s106 = sor.u32 %s104, %s105
      %p107 = scmp.eq.s32.totalorder %s106, 0
      %s109 = sadd.s32 %s108, 1
      %s110 = scalar_select %p107, %s108, %s109
      %p113 = pneg %p107
      %p114 = scmp.eq.s32.totalorder %s14, 1
      %p115 = por %p113, %p114
      %p116 = scmp.ne.s32.totalorder %s108, %s111
      %p117 = scmp.eq.s32.totalorder %s14, 0
      %p118 = por %p116, %p117
      %p119 = scmp.ne.s32.totalorder %s108, %s111
      %p120 = scmp.eq.s32.totalorder %s19, 1
      %p121 = por %p119, %p120
      %p122 = scmp.ne.s32.totalorder %s111, %s112
      %p123 = scmp.eq.s32.totalorder %s19, 0
      %p124 = por %p122, %p123
      %p125 = scmp.ne.s32.totalorder %s111, %s112
      %p126 = scmp.eq.s32.totalorder %s20, 1
      %p127 = por %p125, %p126
      %p129 = scmp.ne.s32.totalorder %s112, %s128
      %p130 = scmp.eq.s32.totalorder %s20, 0
      %p131 = por %p129, %p130
      %p132 = scmp.le.s32.totalorder 1, %s14
      %p133 = scmp.lt.s32.totalorder %s14, 3
      %p134 = pnand %p132, %p133
      %p135 = pneg %p134
      // Predicated region
      $region9: #{_unnamed_function_.1} parent=5 // pred_check
        _
      $region10: #{_unnamed_function_.1} parent=5 // pred_check_branch
        %137 = sbr.rel (%p134) target = $region12
      $region11: #{_unnamed_function_.1} parent=5 // pred_region
        %s138 = ssub.s32 %s14, 1
        // Predicated region
        $region13: #{_unnamed_function_.1} parent=11 // pred_check
          %p139 = pneg %p47
        $region14: #{_unnamed_function_.1} parent=11 // pred_check_branch
          %141 = sbr.rel (%p139) target = $region16
        $region15: #{_unnamed_function_.1} parent=11 // pred_region
          %s143 = ssub.s32 64, 64
          %144 = vsyncadd [#allocation3], %s143
          %s146 = sshll.u32 [#allocation2], 4
          %s147 = int_to_ptr.vmem [resolvable:$true] %s146
          %149 = dma.hbm_to_vmem [thread:$0]  %s0, 64, %s147, [#allocation3]
        $region16: #{_unnamed_function_.1} parent=11 // pred_fallthru
          _
        // Predicated region
        $region17: #{_unnamed_function_.1} parent=11 // pred_check
          %p150 = pneg %p68
        $region18: #{_unnamed_function_.1} parent=11 // pred_check_branch
          %152 = sbr.rel (%p150) target = $region20
        $region19: #{_unnamed_function_.1} parent=11 // pred_region
          %s154 = ssub.s32 64, 64
          %155 = vsyncadd [#allocation6], %s154
          %s157 = sshll.u32 [#allocation5], 4
          %s158 = int_to_ptr.vmem [resolvable:$true] %s157
          %160 = dma.hbm_to_vmem [thread:$0]  %s1, 64, %s158, [#allocation6]
        $region20: #{_unnamed_function_.1} parent=11 // pred_fallthru
          _
      $region12: #{_unnamed_function_.1} parent=5 // pred_fallthru
        _
      %p161 = scmp.lt.s32.totalorder %s14, 2
      // Predicated region
      $region21: #{_unnamed_function_.1} parent=5 // pred_check
        %p162 = pneg %p161
      $region22: #{_unnamed_function_.1} parent=5 // pred_check_branch
        %164 = sbr.rel (%p162) target = $region24
      $region23: #{_unnamed_function_.1} parent=5 // pred_region
        // Predicated region
        $region25: #{_unnamed_function_.1} parent=23 // pred_check
          %p165 = pneg %p90
        $region26: #{_unnamed_function_.1} parent=23 // pred_check_branch
          %167 = sbr.rel (%p165) target = $region28
        $region27: #{_unnamed_function_.1} parent=23 // pred_region
          %s168 = sand.u32 %s14, 1
          %s169 = scalar_lea.sflag [#allocation3], %s168
          %s170 = sand.u32 %s80, 1
          %s171 = smul.addr %s170, 8
          %s172 = scalar_lea.vmem [#allocation7], %s171
          %s173 = smul.u32 2, %s22
          %s175 = ssub.s32 128, 128
          %176 = vsyncadd %s169, %s175
          %s177 = smul.addr %s21, 2
          %s178 = sadd.s32 %s173, %s177
          %s179 = smul.addr %s178, 64
          %s180 = scalar_lea.hbm %s2, %s179
          %s182 = sshll.u32 %s172, 4
          %s183 = int_to_ptr.vmem [resolvable:$true] %s182
          %185 = dma.hbm_to_vmem [thread:$0]  %s180, 128, %s183, %s169
        $region28: #{_unnamed_function_.1} parent=23 // pred_fallthru
          _
      $region24: #{_unnamed_function_.1} parent=5 // pred_fallthru
        _
      %p186 = scmp.le.s32.totalorder 1, %s14
      %p187 = scmp.lt.s32.totalorder %s14, 3
      %p188 = pnand %p186, %p187
      %p189 = pneg %p188
      // Predicated region
      $region29: #{_unnamed_function_.1} parent=5 // pred_check
        _
      $region30: #{_unnamed_function_.1} parent=5 // pred_check_branch
        %191 = sbr.rel (%p188) target = $region32
      $region31: #{_unnamed_function_.1} parent=5 // pred_region
        %s192 = ssub.s32 %s14, 1
        // Predicated region
        $region33: #{_unnamed_function_.1} parent=31 // pred_check
          %p193 = pneg %p47
        $region34: #{_unnamed_function_.1} parent=31 // pred_check_branch
          %195 = sbr.rel (%p193) target = $region36
        $region35: #{_unnamed_function_.1} parent=31 // pred_region
          %196 = dma.done [#allocation3], 64
        $region36: #{_unnamed_function_.1} parent=31 // pred_fallthru
          _
        // Predicated region
        $region37: #{_unnamed_function_.1} parent=31 // pred_check
          %p197 = pneg %p68
        $region38: #{_unnamed_function_.1} parent=31 // pred_check_branch
          %199 = sbr.rel (%p197) target = $region40
        $region39: #{_unnamed_function_.1} parent=31 // pred_region
          %200 = dma.done [#allocation6], 64
        $region40: #{_unnamed_function_.1} parent=31 // pred_fallthru
          _
        %s201 = sand.u32 %s19, 1
        %s202 = scalar_lea.sflag [#allocation3], %s201
        %s203 = sand.u32 %s83, 1
        %s204 = smul.addr %s203, 8
        %s205 = scalar_lea.vmem [#allocation7], %s204
        // Predicated region
        $region41: #{_unnamed_function_.1} parent=31 // pred_check
          %p206 = pneg %p96
        $region42: #{_unnamed_function_.1} parent=31 // pred_check_branch
          %208 = sbr.rel (%p206) target = $region44
        $region43: #{_unnamed_function_.1} parent=31 // pred_region
          %209 = dma.done %s202, 128
        $region44: #{_unnamed_function_.1} parent=31 // pred_fallthru
          _
        %p210 = pneg %p47
        %p211 = pneg %p44
        %p212 = pneg %p68
        %p213 = pneg %p65
        %s214 = sand.u32 %s19, 1
        %s215 = scalar_lea.sflag [#allocation3], %s214
        %s216 = sand.u32 %s83, 1
        %s217 = smul.addr %s216, 8
        %s218 = scalar_lea.vmem [#allocation7], %s217
        %p219 = pneg %p96
        %p220 = pneg %p93
        %p221 = pneg %p124
        %p222 = pneg %p121
        %s223 = sand.u32 %s111, 1
        %s224 = scalar_lea.sflag [#allocation4], %s223
        %s225 = sand.u32 %s111, 1
        %s226 = smul.addr %s225, 8
        %s227 = scalar_lea.vmem [#allocation8], %s226
        %s228 = smul.u32 2, %s24
        %s229 = smul.u32 2, %s24
        %v230 = vld [vmem:[%s205] sm:$0xff]
        %v231 = vld [vmem:[#allocation2] sm:$0xf]
        %v232 = vld [vmem:[#allocation5] sm:$0xf]
        %234 = vset.pattern.permute.xlu0 0
        %235 = vperm.xlu0 %234, %v232
        %v236 = vpop.permute.xlu0 %235
        %v239 = vcombine.high %v230, %v230
        %vm240 = vcmask 31744
        %v242 = vsel %vm240, %v231, 0
        %vm244 = vcmask 1043456
        %v245 = vsel %vm244, %v230, 0
        %v247 = vsel %vm244, %v239, 0
        %249 = vmatprep.subr.mxu0 %v247
        %250 = vmatpush1.msra.mxu0 %v245
        %251 = vmatprep.subr.mxu0 0.0
        %252 = vmatpush1.msra.mxu0 0.0
        %253 = vmatprep.subr.mxu0 0.0
        %254 = vmatpush1.msra.mxu0 0.0
        %255 = vmatprep.subr.mxu0 0.0
        %256 = vmatpush1.msra.mxu0 0.0
        %257 = vmatprep.subr.mxu0 0.0
        %258 = vmatpush1.msra.mxu0 0.0
        %259 = vmatprep.subr.mxu0 0.0
        %260 = vmatpush1.msra.mxu0 0.0
        %261 = vmatprep.subr.mxu0 0.0
        %262 = vmatpush1.msra.mxu0 0.0
        %263 = vmatprep.subr.mxu0 0.0
        %264 = vmatpush1.msra.mxu0 0.0
        %265 = vmatprep.subr.mxu0 0.0
        %266 = vmatpush1.msra.mxu0 0.0
        %267 = vmatprep.subr.mxu0 0.0
        %268 = vmatpush1.msra.mxu0 0.0
        %269 = vmatprep.subr.mxu0 0.0
        %270 = vmatpush1.msra.mxu0 0.0
        %271 = vmatprep.subr.mxu0 0.0
        %272 = vmatpush1.msra.mxu0 0.0
        %273 = vmatprep.subr.mxu0 0.0
        %274 = vmatpush1.msra.mxu0 0.0
        %275 = vmatprep.subr.mxu0 0.0
        %276 = vmatpush1.msra.mxu0 0.0
        %277 = vmatprep.subr.mxu0 0.0
        %278 = vmatpush1.msra.mxu0 0.0
        %279 = vmatprep.subr.mxu0 0.0
        %280 = vmatpush1.msra.mxu0 0.0
        %281 = vmatprep.subr.mxu0 0.0
        %282 = vmatpush1.msra.mxu0 0.0
        %283 = vmatprep.subr.mxu0 0.0
        %284 = vmatpush1.msra.mxu0 0.0
        %285 = vmatprep.subr.mxu0 0.0
        %286 = vmatpush1.msra.mxu0 0.0
        %287 = vmatprep.subr.mxu0 0.0
        %288 = vmatpush1.msra.mxu0 0.0
        %289 = vmatprep.subr.mxu0 0.0
        %290 = vmatpush1.msra.mxu0 0.0
        %291 = vmatprep.subr.mxu0 0.0
        %292 = vmatpush1.msra.mxu0 0.0
        %293 = vmatprep.subr.mxu0 0.0
        %294 = vmatpush1.msra.mxu0 0.0
        %295 = vmatprep.subr.mxu0 0.0
        %296 = vmatpush1.msra.mxu0 0.0
        %297 = vmatprep.subr.mxu0 0.0
        %298 = vmatpush1.msra.mxu0 0.0
        %299 = vmatprep.subr.mxu0 0.0
        %300 = vmatpush1.msra.mxu0 0.0
        %301 = vmatprep.subr.mxu0 0.0
        %302 = vmatpush1.msra.mxu0 0.0
        %303 = vmatprep.subr.mxu0 0.0
        %304 = vmatpush1.msra.mxu0 0.0
        %305 = vmatprep.subr.mxu0 0.0
        %306 = vmatpush1.msra.mxu0 0.0
        %307 = vmatprep.subr.mxu0 0.0
        %308 = vmatpush1.msra.mxu0 0.0
        %309 = vmatprep.subr.mxu0 0.0
        %310 = vmatpush1.msra.mxu0 0.0
        %311 = vmatprep.subr.mxu0 0.0
        %312 = vmatpush1.msra.mxu0 0.0
        %313 = vmatprep.mubr.f32.mxu0 0.0
        %314 = vmatmul.mubr.f32.gmra.mrb[0].mxu0 %v242
        %v315 = vpop.f32.mrb[0].mxu0
        %v316 = vadd.f32 %v236, %v315
        %v317 = vpop.f32.mrb[0].mxu0
        %v318 = vadd.f32 %v236, %v317
        %319 = vdwg.mxu0
        %v321 = vadd.f32 %v316, %v230
        %v322 = vadd.f32 %v318, %v239
        %v325 = vcombine.low %v321, %v322
        %327 = vst [vmem:[%s227] sm:$0xff] %v325
        %s328 = sand.u32 %s111, 1
        %s329 = scalar_lea.sflag [#allocation4], %s328
        %s330 = sand.u32 %s111, 1
        %s331 = smul.addr %s330, 8
        %s332 = scalar_lea.vmem [#allocation8], %s331
        // Predicated region
        $region45: #{_unnamed_function_.1} parent=31 // pred_check
          %p333 = pneg %p121
        $region46: #{_unnamed_function_.1} parent=31 // pred_check_branch
          %335 = sbr.rel (%p333) target = $region48
        $region47: #{_unnamed_function_.1} parent=31 // pred_region
          %s336 = smul.u32 2, %s24
          %s338 = ssub.s32 128, 128
          %339 = vsyncadd %s329, %s338
          %s340 = smul.addr %s23, 2
          %s341 = sadd.s32 %s336, %s340
          %s342 = smul.addr %s341, 64
          %s343 = scalar_lea.hbm %s3, %s342
          %s345 = sshll.u32 %s332, 4
          %s346 = int_to_ptr.vmem [resolvable:$true] %s345
          %348 = dma.vmem_to_hbm [thread:$0]  %s346, 128, %s343, %s329
        $region48: #{_unnamed_function_.1} parent=31 // pred_fallthru
          _
      $region32: #{_unnamed_function_.1} parent=5 // pred_fallthru
        _
      %p349 = scmp.le.s32.totalorder 2, %s14
      // Predicated region
      $region49: #{_unnamed_function_.1} parent=5 // pred_check
        %p350 = pneg %p349
      $region50: #{_unnamed_function_.1} parent=5 // pred_check_branch
        %352 = sbr.rel (%p350) target = $region52
      $region51: #{_unnamed_function_.1} parent=5 // pred_region
        %s353 = ssub.s32 %s14, 2
        // Predicated region
        $region53: #{_unnamed_function_.1} parent=51 // pred_check
          %p354 = pneg %p127
        $region54: #{_unnamed_function_.1} parent=51 // pred_check_branch
          %356 = sbr.rel (%p354) target = $region56
        $region55: #{_unnamed_function_.1} parent=51 // pred_region
          %s357 = sand.u32 %s112, 1
          %s358 = scalar_lea.sflag [#allocation4], %s357
          %s359 = sand.u32 %s112, 1
          %s360 = smul.addr %s359, 8
          %s361 = scalar_lea.vmem [#allocation8], %s360
          %362 = dma.done %s358, 128
        $region56: #{_unnamed_function_.1} parent=51 // pred_fallthru
          _
      $region52: #{_unnamed_function_.1} parent=5 // pred_fallthru
        _
    $region6: #{_unnamed_function_.1} parent=1 // loop_footer
      %s18 = sadd.s32 1, %s14
    $region7: #{_unnamed_function_.1} parent=1 // loop_footer_branch
      %13 = sbr.rel target = $region3
    $region8: #{_unnamed_function_.1} parent=1 // loop_exit
      _
    %363 = vsyncpa [#allocation3], 1
    %s364 = scalar_lea.sflag [#allocation3], 1
    %365 = vsyncpa %s364, 1
    %366 = vsyncpa [#allocation6], 1
    %367 = vsyncpa [#allocation4], 1
    %s368 = scalar_lea.sflag [#allocation4], 1
    %369 = vsyncpa %s368, 1

</llo_original>
